<compile_context>
chip_gen: v7x
topology: tpu7x:2x2x1
jax: 0.10.0
libtpu: 0.0.40
codegen_flags: <defaults>
</compile_context>

<pallas_src>
import math

import jax
import jax.numpy as jnp
from jax.experimental import pallas as pl
from jax.experimental.pallas import tpu as pltpu

NUM_GROUPS = 32
EPS = 1e-6


# ---------------------------------------------------------------------------
# Pass 1: GroupNorm statistics (tiled over S, accumulate in VMEM scratch).
# ---------------------------------------------------------------------------
def gn_stats_kernel(x_ref, a_ref, mean_ref, rstd_ref, s1_ref, s2_ref):
    si = pl.program_id(1)

    @pl.when(si == 0)
    def _():
        s1_ref[...] = jnp.zeros_like(s1_ref)
        s2_ref[...] = jnp.zeros_like(s2_ref)

    x = x_ref[0]                                           # (TS, C) f32
    s1_ref[...] += jnp.sum(x, axis=0, keepdims=True)       # (1, C)
    s2_ref[...] += jnp.sum(x * x, axis=0, keepdims=True)   # (1, C)

    @pl.when(si == pl.num_programs(1) - 1)
    def _():
        # Single lane-dense (1,C)x(C,C) group-averaging matmul (A = M M^T / n)
        # instead of the two-hop (1,G) path (G=32 < 128 lanes would be masked).
        a = a_ref[...]
        mean_c = jnp.dot(s1_ref[...], a, preferred_element_type=jnp.float32)
        msq_c = jnp.dot(s2_ref[...], a, preferred_element_type=jnp.float32)
        # Clamp to avoid negative variance from E[x^2]-E[x]^2 cancellation.
        var_c = jnp.maximum(msq_c - mean_c * mean_c, 0.0)
        mean_ref[0] = mean_c
        rstd_ref[0] = jax.lax.rsqrt(var_c + EPS)


# ---------------------------------------------------------------------------
# Pass 2: apply GroupNorm affine + fused qkv projection (one (C,3C) matmul).
# ---------------------------------------------------------------------------
def gn_qkv_kernel(x_ref, mean_ref, rstd_ref, gamma_ref, beta_ref,
                  wqkv_ref, bqkv_ref, q_ref, k_ref, v_ref):
    C = q_ref.shape[-1]
    x = x_ref[0]                                           # (TS, C) f32
    xn = (x - mean_ref[0]) * rstd_ref[0]                   # f32 normalize
    xn = xn * gamma_ref[...] + beta_ref[...]
    # bf16 operands, f32 accumulation on the MXU; output N = 3C keeps MXU fed.
    qkv = jnp.dot(xn.astype(jnp.bfloat16), wqkv_ref[...],
                  preferred_element_type=jnp.float32) + bqkv_ref[...]
    # 1/sqrt(C) scale already folded into the q columns of wqkv/bqkv (wrapper).
    q_ref[0] = qkv[:, :C].astype(jnp.bfloat16)
    k_ref[0] = qkv[:, C:2 * C].astype(jnp.bfloat16)
    v_ref[0] = qkv[:, 2 * C:].astype(jnp.bfloat16)


# ---------------------------------------------------------------------------
# Pass 3: flash attention over KV tiles + proj_out + residual.
# ---------------------------------------------------------------------------
def flash_attn_kernel(x_ref, q_ref, k_ref, v_ref, wp_ref, bp_ref, o_ref,
                      m_ref, l_ref, acc_ref):
    ki = pl.program_id(2)

    @pl.when(ki == 0)
    def _():
        m_ref[...] = jnp.full_like(m_ref, -jnp.inf)
        l_ref[...] = jnp.zeros_like(l_ref)
        acc_ref[...] = jnp.zeros_like(acc_ref)

    q = q_ref[0]                                           # (TQ, C) bf16, pre-scaled
    k = k_ref[0]                                           # (TK, C) bf16
    v = v_ref[0]                                           # (TK, C) bf16

    # q @ k^T without materializing a transpose: contract last dims.
    s = jax.lax.dot_general(q, k, (((1,), (1,)), ((), ())),
                            preferred_element_type=jnp.float32)   # (TQ, TK) f32

    m_prev = m_ref[...]
    m_new = jnp.maximum(m_prev, jnp.max(s, axis=-1, keepdims=True))
    alpha = jnp.exp(m_prev - m_new)                        # f32 softmax math
    p = jnp.exp(s - m_new)
    l_ref[...] = alpha * l_ref[...] + jnp.sum(p, axis=-1, keepdims=True)
    acc_ref[...] = alpha * acc_ref[...] + jnp.dot(
        p.astype(jnp.bfloat16), v, preferred_element_type=jnp.float32)
    m_ref[...] = m_new

    @pl.when(ki == pl.num_programs(2) - 1)
    def _():
        # EUP approx reciprocal: multiply instead of divide in the epilogue.
        h = acc_ref[...] * pl.reciprocal(l_ref[...], approx=True)      # (TQ, C)
        h = jnp.dot(h.astype(jnp.bfloat16), wp_ref[...],
                    preferred_element_type=jnp.float32) + bp_ref[...]
        o_ref[0] = x_ref[0] + h


# ---------------------------------------------------------------------------
# Wrapper
# ---------------------------------------------------------------------------
def _fit_tile(n, pref):
    t = min(pref, n)
    while n % t != 0:
        t //= 2
    return max(t, 1)


def attn_block(x_nchw, params, *, tq=256, tk=256, ts=256):
    """tq/tk/ts: preferred tile sizes (256-multiples for v6e/v7x, 128 for v5e)."""
    B, C, H, W = x_nchw.shape
    S = H * W
    G = NUM_GROUPS
    assert C % G == 0
    gs = C // G

    TQ = _fit_tile(S, tq)
    TK = _fit_tile(S, tk)
    TS = _fit_tile(S, ts)

    # NCHW -> (B, S, C), channels on lanes.
    x = jnp.transpose(x_nchw, (0, 2, 3, 1)).reshape(B, S, C).astype(jnp.float32)

    # Group-averaging matrix A[c, c'] = [group(c)==group(c')] / (S * gs).
    group_id = jnp.arange(C) // gs
    A = (group_id[:, None] == group_id[None, :]).astype(jnp.float32) / float(S * gs)

    # Fused qkv weights (C, 3C): fold 1/sqrt(C) attention scale into q columns.
    scale = 1.0 / math.sqrt(C)
    w_qkv = jnp.concatenate(
        [params["wq_t"] * scale, params["wk_t"], params["wv_t"]],
        axis=1).astype(jnp.bfloat16)                       # (C, 3C) bf16
    b_qkv = jnp.concatenate(
        [params["bq"] * scale, params["bk"], params["bv"]], axis=1)  # (1, 3C) f32
    wp = params["wp_t"].astype(jnp.bfloat16)               # (C, C) bf16
    bp = params["bp"]                                      # (1, C) f32
    gamma = params["gamma"]
    beta = params["beta"]

    # ---- pass 1: GroupNorm stats -> (B, 1, C) mean, rstd ----
    mean, rstd = pl.pallas_call(
        gn_stats_kernel,
        out_shape=(jax.ShapeDtypeStruct((B, 1, C), jnp.float32),
                   jax.ShapeDtypeStruct((B, 1, C), jnp.float32)),
        grid=(B, S // TS),
        in_specs=[
            pl.BlockSpec((1, TS, C), lambda b, si: (b, si, 0)),
            pl.BlockSpec((C, C), lambda b, si: (0, 0)),
        ],
        out_specs=(
            pl.BlockSpec((1, 1, C), lambda b, si: (b, 0, 0)),
            pl.BlockSpec((1, 1, C), lambda b, si: (b, 0, 0)),
        ),
        scratch_shapes=[pltpu.VMEM((1, C), jnp.float32),
                        pltpu.VMEM((1, C), jnp.float32)],
        compiler_params=pltpu.CompilerParams(
            dimension_semantics=("parallel", "arbitrary")),
    )(x, A)

    # ---- pass 2: normalize + fused qkv projection -> bf16 q, k, v ----
    q, k, v = pl.pallas_call(
        gn_qkv_kernel,
        out_shape=tuple(jax.ShapeDtypeStruct((B, S, C), jnp.bfloat16)
                        for _ in range(3)),
        grid=(B, S // TS),
        in_specs=[
            pl.BlockSpec((1, TS, C), lambda b, si: (b, si, 0)),   # x
            pl.BlockSpec((1, 1, C), lambda b, si: (b, 0, 0)),     # mean
            pl.BlockSpec((1, 1, C), lambda b, si: (b, 0, 0)),     # rstd
            pl.BlockSpec((1, C), lambda b, si: (0, 0)),           # gamma
            pl.BlockSpec((1, C), lambda b, si: (0, 0)),           # beta
            pl.BlockSpec((C, 3 * C), lambda b, si: (0, 0)),       # w_qkv (bf16)
            pl.BlockSpec((1, 3 * C), lambda b, si: (0, 0)),       # b_qkv
        ],
        out_specs=tuple(pl.BlockSpec((1, TS, C), lambda b, si: (b, si, 0))
                        for _ in range(3)),
        compiler_params=pltpu.CompilerParams(
            dimension_semantics=("parallel", "parallel")),
    )(x, mean, rstd, gamma, beta, w_qkv, b_qkv)

    # ---- pass 3: flash attention + proj_out + residual ----
    # Query-tile axis is "parallel" so it shards across v7x's 2 TensorCores even
    # when B is small; KV axis is the "arbitrary" (reduction) axis, last in grid.
    # NOTE: the constant wp/bp operands could be single-buffered on v7x via
    # pipeline_mode=pl.Buffered(1); left at default for portability.
    out = pl.pallas_call(
        flash_attn_kernel,
        out_shape=jax.ShapeDtypeStruct((B, S, C), jnp.float32),
        grid=(B, S // TQ, S // TK),
        in_specs=[
            pl.BlockSpec((1, TQ, C), lambda b, qi, ki: (b, qi, 0)),   # x (residual)
            pl.BlockSpec((1, TQ, C), lambda b, qi, ki: (b, qi, 0)),   # q
            pl.BlockSpec((1, TK, C), lambda b, qi, ki: (b, ki, 0)),   # k
            pl.BlockSpec((1, TK, C), lambda b, qi, ki: (b, ki, 0)),   # v
            pl.BlockSpec((C, C), lambda b, qi, ki: (0, 0)),           # wp (bf16)
            pl.BlockSpec((1, C), lambda b, qi, ki: (0, 0)),           # bp
        ],
        out_specs=pl.BlockSpec((1, TQ, C), lambda b, qi, ki: (b, qi, 0)),
        scratch_shapes=[pltpu.VMEM((TQ, 1), jnp.float32),     # m (running max)
                        pltpu.VMEM((TQ, 1), jnp.float32),     # l (running denom)
                        pltpu.VMEM((TQ, C), jnp.float32)],    # acc
        compiler_params=pltpu.CompilerParams(
            dimension_semantics=("parallel", "parallel", "arbitrary"),
            vmem_limit_bytes=64 * 1024 * 1024),
    )(x, q, k, v, wp, bp)

    return jnp.transpose(out.reshape(B, H, W, C), (0, 3, 1, 2))


def make_params(key, C):
    ks = jax.random.split(key, 10)
    scale = 0.05

    def conv_w(k):
        # PyTorch Conv2d(k=1) weight is (C_out, C_in, 1, 1); store transposed (C_in, C_out)
        w = jax.random.normal(k, (C, C), jnp.float32) * scale
        return w.T

    return dict(
        gamma=(1.0 + 0.1 * jax.random.normal(ks[0], (1, C), jnp.float32)),
        beta=(0.1 * jax.random.normal(ks[1], (1, C), jnp.float32)),
        wq_t=conv_w(ks[2]), bq=0.01 * jax.random.normal(ks[3], (1, C), jnp.float32),
        wk_t=conv_w(ks[4]), bk=0.01 * jax.random.normal(ks[5], (1, C), jnp.float32),
        wv_t=conv_w(ks[6]), bv=0.01 * jax.random.normal(ks[7], (1, C), jnp.float32),
        wp_t=conv_w(ks[8]), bp=0.01 * jax.random.normal(ks[9], (1, C), jnp.float32),
    )


def reference_attn_block(x_nchw, params):
    """Pure-JAX reference mirroring the PyTorch module semantics."""
    B, C, H, W = x_nchw.shape
    G = NUM_GROUPS
    S = H * W
    x = x_nchw.astype(jnp.float32)

    # GroupNorm
    xg = x.reshape(B, G, (C // G) * H * W)
    mean = jnp.mean(xg, axis=-1, keepdims=True)
    var = jnp.mean((xg - mean) ** 2, axis=-1, keepdims=True)
    xn = ((xg - mean) / jnp.sqrt(var + EPS)).reshape(B, C, H, W)
    gamma = params["gamma"].reshape(1, C, 1, 1)
    beta = params["beta"].reshape(1, C, 1, 1)
    xn = xn * gamma + beta

    def conv1x1(h, w_t, b):  # w_t is (C_in, C_out)
        return jnp.einsum("bchw,co->bohw", h, w_t) + b.reshape(1, C, 1, 1)

    q = conv1x1(xn, params["wq_t"], params["bq"]).reshape(B, C, S).transpose(0, 2, 1)
    k = conv1x1(xn, params["wk_t"], params["bk"]).reshape(B, C, S).transpose(0, 2, 1)
    v = conv1x1(xn, params["wv_t"], params["bv"]).reshape(B, C, S).transpose(0, 2, 1)

    scores = jnp.einsum("bsc,btc->bst", q, k) / jnp.sqrt(jnp.float32(C))
    p = jax.nn.softmax(scores, axis=-1)
    h = jnp.einsum("bst,btc->bsc", p, v)                      # (B, S, C)
    h = h.transpose(0, 2, 1).reshape(B, C, H, W)
    h = conv1x1(h, params["wp_t"], params["bp"])
    return x + h


if __name__ == "__main__":
    # C must be divisible by GroupNorm's 32 groups; S=256 with 128-tiles so the
    # online-softmax / multi-tile reduction paths are actually exercised.
    B, C, H, W = 2, 64, 16, 16
    key = jax.random.PRNGKey(0)
    kx, kp = jax.random.split(key)
    x = jax.random.normal(kx, (B, C, H, W), jnp.float32)
    params = make_params(kp, C)

    out = attn_block(x, params, tq=128, tk=128, ts=128)
    out = jax.block_until_ready(out)

    ref = reference_attn_block(x, params)
    assert out.shape == (B, C, H, W)
    err = float(jnp.max(jnp.abs(out - ref)))
    # bf16 MXU operands + approx reciprocal => looser tolerance than pure f32.
    assert err < 3e-2, err

    print("KERNEL_OK")
</pallas_src>

<mosaic_0001>
module attributes {stable_mosaic.version = 11 : i64} {
  func.func @gn_stats_kernel(%arg0: i32, %arg1: i32, %arg2: memref<1x128x64xf32, #tpu.memory_space<vmem>>, %arg3: memref<64x64xf32, #tpu.memory_space<vmem>>, %arg4: memref<1x1x64xf32, #tpu.memory_space<vmem>>, %arg5: memref<1x1x64xf32, #tpu.memory_space<vmem>>, %arg6: memref<1x64xf32, #tpu.memory_space<vmem>>, %arg7: memref<1x64xf32, #tpu.memory_space<vmem>>) attributes {dimension_semantics = [#tpu.dimension_semantics<parallel>, #tpu.dimension_semantics<arbitrary>], iteration_bounds = array<i64: 2, 2>, scalar_prefetch = 0 : i64, scratch_operands = 2 : i64, tpu.core_type = #tpu.core_type<tc>, window_params = [{transform_indices = @transform_0, window_bounds = array<i64: 1, 128, 64>}, {pipeline_mode = #tpu.pipeline_mode<synchronous>, transform_indices = @transform_1, window_bounds = array<i64: 64, 64>}, {transform_indices = @transform_2, window_bounds = array<i64: 1, 1, 64>}, {transform_indices = @transform_3, window_bounds = array<i64: 1, 1, 64>}]} {
    %c0_i32 = arith.constant 0 : i32
    %0 = arith.cmpi eq, %arg1, %c0_i32 : i32
    %1 = arith.extui %0 : i1 to i32
    %c0_i32_0 = arith.constant 0 : i32
    %2 = arith.cmpi ne, %1, %c0_i32_0 : i32
    scf.if %2 {
      %cst_13 = arith.constant 0.000000e+00 : f32
      %19 = vector.broadcast %cst_13 : f32 to vector<1x64xf32>
      %c0_14 = arith.constant 0 : index
      %c0_15 = arith.constant 0 : index
      %20 = vector.load %arg6[%c0_14, %c0_15] : memref<1x64xf32, #tpu.memory_space<vmem>>, vector<1x64xf32>
      tpu.vector_store %arg6[%c0_14, %c0_15], %19 {strides = array<i32>} : memref<1x64xf32, #tpu.memory_space<vmem>>, vector<1x64xf32>,
      %cst_16 = arith.constant 0.000000e+00 : f32
      %21 = vector.broadcast %cst_16 : f32 to vector<1x64xf32>
      %c0_17 = arith.constant 0 : index
      %c0_18 = arith.constant 0 : index
      %22 = vector.load %arg7[%c0_17, %c0_18] : memref<1x64xf32, #tpu.memory_space<vmem>>, vector<1x64xf32>
      tpu.vector_store %arg7[%c0_17, %c0_18], %21 {strides = array<i32>} : memref<1x64xf32, #tpu.memory_space<vmem>>, vector<1x64xf32>,
    } else {
    }
    %c0 = arith.constant 0 : index
    %c0_1 = arith.constant 0 : index
    %c0_2 = arith.constant 0 : index
    %3 = vector.load %arg2[%c0, %c0_1, %c0_2] : memref<1x128x64xf32, #tpu.memory_space<vmem>>, vector<1x128x64xf32>
    %4 = vector.shape_cast %3 : vector<1x128x64xf32> to vector<128x64xf32>
    %c0_3 = arith.constant 0 : index
    %c0_4 = arith.constant 0 : index
    %5 = vector.load %arg6[%c0_3, %c0_4] : memref<1x64xf32, #tpu.memory_space<vmem>>, vector<1x64xf32>
    %cst = arith.constant dense<0.000000e+00> : vector<64xf32>
    %6 = vector.multi_reduction <add>, %4, %cst [0] : vector<128x64xf32> to vector<64xf32>
    %7 = vector.shape_cast %6 : vector<64xf32> to vector<1x64xf32>
    %8 = arith.addf %5, %7 : vector<1x64xf32>
    %c0_5 = arith.constant 0 : index
    %c0_6 = arith.constant 0 : index
    %9 = vector.load %arg6[%c0_5, %c0_6] : memref<1x64xf32, #tpu.memory_space<vmem>>, vector<1x64xf32>
    tpu.vector_store %arg6[%c0_5, %c0_6], %8 {strides = array<i32>} : memref<1x64xf32, #tpu.memory_space<vmem>>, vector<1x64xf32>,
    %c0_7 = arith.constant 0 : index
    %c0_8 = arith.constant 0 : index
    %10 = vector.load %arg7[%c0_7, %c0_8] : memref<1x64xf32, #tpu.memory_space<vmem>>, vector<1x64xf32>
    %11 = arith.mulf %4, %4 : vector<128x64xf32>
    %cst_9 = arith.constant dense<0.000000e+00> : vector<64xf32>
    %12 = vector.multi_reduction <add>, %11, %cst_9 [0] : vector<128x64xf32> to vector<64xf32>
    %13 = vector.shape_cast %12 : vector<64xf32> to vector<1x64xf32>
    %14 = arith.addf %10, %13 : vector<1x64xf32>
    %c0_10 = arith.constant 0 : index
    %c0_11 = arith.constant 0 : index
    %15 = vector.load %arg7[%c0_10, %c0_11] : memref<1x64xf32, #tpu.memory_space<vmem>>, vector<1x64xf32>
    tpu.vector_store %arg7[%c0_10, %c0_11], %14 {strides = array<i32>} : memref<1x64xf32, #tpu.memory_space<vmem>>, vector<1x64xf32>,
    %c1_i32 = arith.constant 1 : i32
    %16 = arith.cmpi eq, %arg1, %c1_i32 : i32
    %17 = arith.extui %16 : i1 to i32
    %c0_i32_12 = arith.constant 0 : i32
    %18 = arith.cmpi ne, %17, %c0_i32_12 : i32
    scf.if %18 {
      %c0_13 = arith.constant 0 : index
      %c0_14 = arith.constant 0 : index
      %19 = vector.load %arg3[%c0_13, %c0_14] : memref<64x64xf32, #tpu.memory_space<vmem>>, vector<64x64xf32>
      %c0_15 = arith.constant 0 : index
      %c0_16 = arith.constant 0 : index
      %20 = vector.load %arg6[%c0_15, %c0_16] : memref<1x64xf32, #tpu.memory_space<vmem>>, vector<1x64xf32>
      %cst_17 = arith.constant dense<0.000000e+00> : vector<1x64xf32>
      %21 = tpu.matmul %20, %19, %cst_17 {dimension_numbers = #tpu.dot_dimension_numbers<[1], [0], [0], [1], [0, 0, 1, 1], [], []>} : vector<1x64xf32>, vector<64x64xf32>, vector<1x64xf32> -> vector<1x64xf32>
      %c0_18 = arith.constant 0 : index
      %c0_19 = arith.constant 0 : index
      %22 = vector.load %arg7[%c0_18, %c0_19] : memref<1x64xf32, #tpu.memory_space<vmem>>, vector<1x64xf32>
      %cst_20 = arith.constant dense<0.000000e+00> : vector<1x64xf32>
      %23 = tpu.matmul %22, %19, %cst_20 {dimension_numbers = #tpu.dot_dimension_numbers<[1], [0], [0], [1], [0, 0, 1, 1], [], []>} : vector<1x64xf32>, vector<64x64xf32>, vector<1x64xf32> -> vector<1x64xf32>
      %24 = arith.mulf %21, %21 : vector<1x64xf32>
      %25 = arith.subf %23, %24 : vector<1x64xf32>
      %cst_21 = arith.constant 0.000000e+00 : f32
      %26 = vector.broadcast %cst_21 : f32 to vector<1x64xf32>
      %27 = arith.maximumf %25, %26 : vector<1x64xf32>
      %c0_22 = arith.constant 0 : index
      %c0_23 = arith.constant 0 : index
      %c0_24 = arith.constant 0 : index
      %28 = vector.load %arg4[%c0_22, %c0_23, %c0_24] : memref<1x1x64xf32, #tpu.memory_space<vmem>>, vector<1x1x64xf32>
      %29 = vector.shape_cast %28 : vector<1x1x64xf32> to vector<1x64xf32>
      %30 = vector.shape_cast %21 : vector<1x64xf32> to vector<1x1x64xf32>
      tpu.vector_store %arg4[%c0_22, %c0_23, %c0_24], %30 {strides = array<i32>} : memref<1x1x64xf32, #tpu.memory_space<vmem>>, vector<1x1x64xf32>,
      %cst_25 = arith.constant 9.99999997E-7 : f32
      %31 = vector.broadcast %cst_25 : f32 to vector<1x64xf32>
      %32 = arith.addf %27, %31 : vector<1x64xf32>
      %33 = math.rsqrt %32 : vector<1x64xf32>
      %c0_26 = arith.constant 0 : index
      %c0_27 = arith.constant 0 : index
      %c0_28 = arith.constant 0 : index
      %34 = vector.load %arg5[%c0_26, %c0_27, %c0_28] : memref<1x1x64xf32, #tpu.memory_space<vmem>>, vector<1x1x64xf32>
      %35 = vector.shape_cast %34 : vector<1x1x64xf32> to vector<1x64xf32>
      %36 = vector.shape_cast %33 : vector<1x64xf32> to vector<1x1x64xf32>
      tpu.vector_store %arg5[%c0_26, %c0_27, %c0_28], %36 {strides = array<i32>} : memref<1x1x64xf32, #tpu.memory_space<vmem>>, vector<1x1x64xf32>,
    } else {
    }
    return
  }
  func.func @transform_0(%arg0: i32, %arg1: i32) -> (i32, i32, i32) {
    %c0_i32 = arith.constant 0 : i32
    %c0_i32_0 = arith.constant 0 : i32
    return %arg0, %arg1, %c0_i32 : i32, i32, i32
  }
  func.func @transform_1(%arg0: i32, %arg1: i32) -> (i32, i32) {
    %c0_i32 = arith.constant 0 : i32
    %c0_i32_0 = arith.constant 0 : i32
    %c0_i32_1 = arith.constant 0 : i32
    return %c0_i32, %c0_i32_0 : i32, i32
  }
  func.func @transform_2(%arg0: i32, %arg1: i32) -> (i32, i32, i32) {
    %c0_i32 = arith.constant 0 : i32
    %c0_i32_0 = arith.constant 0 : i32
    %c0_i32_1 = arith.constant 0 : i32
    return %arg0, %c0_i32, %c0_i32_0 : i32, i32, i32
  }
  func.func @transform_3(%arg0: i32, %arg1: i32) -> (i32, i32, i32) {
    %c0_i32 = arith.constant 0 : i32
    %c0_i32_0 = arith.constant 0 : i32
    %c0_i32_1 = arith.constant 0 : i32
    return %arg0, %c0_i32, %c0_i32_0 : i32, i32, i32
  }
}

</mosaic_0001>

<llo_original>
// kernel: tpu_custom_call.1
$region0: #{tpu_custom_call.1}
  #allocation0 [shape = 'u32[]', space=smem, size = 0x4, offset = 0x4, fixed_abs, tag = 'smem constant byte address 0x4 - core index']
  #allocation1 [shape = 'u32[144,128]{1,0:T(1,128)}', space=vmem, size = 0x12000, scoped, tag = 'internal scratch']
  #allocation2 [shape = 'f32[1,64]{1,0:T(1,128)}', space=vmem, size = 0x200, scoped, tag = 'scratch operand']
  #allocation3 [shape = 'f32[1,64]{1,0:T(1,128)}', space=vmem, size = 0x200, scoped, tag = 'scratch operand']
  %s0 = inlined_call_operand.vmem [shape: f32[2,256,64], index: 0, kind: input, shape index: {}]
  %s1 = inlined_call_operand.vmem [shape: f32[64,64], index: 1, kind: input, shape index: {}]
  %s2 = inlined_call_operand.hbm [shape: f32[2,1,64], index: 2, kind: output, shape index: {0}]
  %s3 = inlined_call_operand.hbm [shape: f32[2,1,64], index: 3, kind: output, shape index: {1}]
  %4 = xla_tuple %s2, %s3
  %s5 = sld [smem:[#allocation0]]
  $region57: #{tpu_custom_call.1} parent=0
    _
  %s7 = ssub.s32 1, %s5
  %s8 = scalar_select 0, %s7, %s5
  $region1: #{tpu_custom_call.1} parent=0
    #allocation4 [shape = 'u8[1024]{0}', space=vmem, size = 0x400, scoped, tag = 'output window, operand 0']
    #allocation5 [shape = 's32[2]{0}', space=sflag, size = 0x8, scoped, tag = 'scoped memory for tpu_custom_call.1']
    #allocation6 [shape = 'u8[1024]{0}', space=vmem, size = 0x400, scoped, tag = 'output window, operand 1']
    #allocation7 [shape = 's32[2]{0}', space=sflag, size = 0x8, scoped, tag = 'scoped memory for tpu_custom_call.1']
    %9 = vsyncpa [#allocation5], 0
    %s10 = scalar_lea.sflag [#allocation5], 1
    %11 = vsyncpa %s10, 0
    %12 = vsyncpa [#allocation7], 0
    %s13 = scalar_lea.sflag [#allocation7], 1
    %14 = vsyncpa %s13, 0
    loop: start=0, step=1, limit=6
    $region2: #{tpu_custom_call.1} parent=1 // loop_pre_header
      _
    $region3: #{tpu_custom_call.1} parent=1 // loop_header
      %s16 = sphi 0, %s20
      %p17 = scmp.ge.s32.totalorder %s16, 6
      %s23 = sphi 0, %s35
      %s24 = sphi 0, %s31
      %s25 = sphi 0, %s23
      %s26 = sphi 0, %s24
      %s27 = sphi 0, %s25
      %s28 = sphi 0, %s26
      %s40 = sphi 0, %s42
      %s43 = sphi 0, %s40
      %s44 = sphi 0, %s43
      %s60 = sphi 0, %s44
      %s64 = sphi 0, %s64
      %s66 = sphi 0, %s64
      %s67 = sphi 0, %s66
      %s81 = sphi 0, %s67
      %s87 = sphi 0, %s89
      %s90 = sphi 0, %s87
      %s91 = sphi 0, %s90
      %s107 = sphi 0, %s91
      %s113 = sphi 0, %s115
      %s116 = sphi 0, %s113
      %s117 = sphi 0, %s116
      %s133 = sphi 0, %s117
    $region4: #{tpu_custom_call.1} parent=1 // loop_header_branch
      %19 = sbr.rel (%p17) target = $region8
    $region5: #{tpu_custom_call.1} parent=1 // loop_body
      %s21 = ssub.s32 %s16, 1
      %s22 = ssub.s32 %s16, 2
      %s29 = sadd.s32 1, %s24
      %p30 = scmp.ge.s32.totalorder %s29, 2
      %s31 = scalar_select %p30, 0, %s29
      %s32 = sadd.s32 1, %s23
      %s33 = scalar_select %p30, %s32, %s23
      %p34 = scmp.ge.s32.totalorder %s33, 2
      %s35 = scalar_select %p34, 0, %s33
      %s36 = ssub.s32 %s23, %s35
      %s37 = ssub.s32 %s24, %s31
      %s38 = sor.u32 %s36, %s37
      %p39 = scmp.eq.s32.totalorder %s38, 0
      %s41 = sadd.s32 %s40, 1
      %s42 = scalar_select %p39, %s40, %s41
      %p45 = pneg %p39
      %p46 = scmp.eq.s32.totalorder %s16, 3
      %p47 = por %p45, %p46
      %p48 = scmp.ne.s32.totalorder %s40, %s43
      %p49 = scmp.eq.s32.totalorder %s16, 0
      %p50 = por %p48, %p49
      %p51 = scmp.ne.s32.totalorder %s40, %s43
      %p52 = scmp.eq.s32.totalorder %s21, 3
      %p53 = por %p51, %p52
      %p54 = scmp.ne.s32.totalorder %s43, %s44
      %p55 = scmp.eq.s32.totalorder %s21, 0
      %p56 = por %p54, %p55
      %p57 = scmp.ne.s32.totalorder %s43, %s44
      %p58 = scmp.eq.s32.totalorder %s22, 3
      %p59 = por %p57, %p58
      %p61 = scmp.ne.s32.totalorder %s44, %s60
      %p62 = scmp.eq.s32.totalorder %s22, 0
      %p63 = por %p61, %p62
      %s65 = sadd.s32 %s64, 1
      %p68 = scmp.eq.s32.totalorder %s16, 3
      %p69 = scmp.ne.s32.totalorder %s64, %s66
      %p70 = scmp.eq.s32.totalorder %s16, 0
      %p71 = por %p69, %p70
      %p72 = scmp.ne.s32.totalorder %s64, %s66
      %p73 = scmp.eq.s32.totalorder %s21, 3
      %p74 = por %p72, %p73
      %p75 = scmp.ne.s32.totalorder %s66, %s67
      %p76 = scmp.eq.s32.totalorder %s21, 0
      %p77 = por %p75, %p76
      %p78 = scmp.ne.s32.totalorder %s66, %s67
      %p79 = scmp.eq.s32.totalorder %s22, 3
      %p80 = por %p78, %p79
      %p82 = scmp.ne.s32.totalorder %s67, %s81
      %p83 = scmp.eq.s32.totalorder %s22, 0
      %p84 = por %p82, %p83
      %s85 = ssub.s32 %s23, %s35
      %p86 = scmp.eq.s32.totalorder %s85, 0
      %s88 = sadd.s32 %s87, 1
      %s89 = scalar_select %p86, %s87, %s88
      %p92 = pneg %p86
      %p93 = scmp.eq.s32.totalorder %s16, 3
      %p94 = por %p92, %p93
      %p95 = scmp.ne.s32.totalorder %s87, %s90
      %p96 = scmp.eq.s32.totalorder %s16, 0
      %p97 = por %p95, %p96
      %p98 = scmp.ne.s32.totalorder %s87, %s90
      %p99 = scmp.eq.s32.totalorder %s21, 3
      %p100 = por %p98, %p99
      %p101 = scmp.ne.s32.totalorder %s90, %s91
      %p102 = scmp.eq.s32.totalorder %s21, 0
      %p103 = por %p101, %p102
      %p104 = scmp.ne.s32.totalorder %s90, %s91
      %p105 = scmp.eq.s32.totalorder %s22, 3
      %p106 = por %p104, %p105
      %p108 = scmp.ne.s32.totalorder %s91, %s107
      %p109 = scmp.eq.s32.totalorder %s22, 0
      %p110 = por %p108, %p109
      %s111 = ssub.s32 %s23, %s35
      %p112 = scmp.eq.s32.totalorder %s111, 0
      %s114 = sadd.s32 %s113, 1
      %s115 = scalar_select %p112, %s113, %s114
      %p118 = pneg %p112
      %p119 = scmp.eq.s32.totalorder %s16, 3
      %p120 = por %p118, %p119
      %p121 = scmp.ne.s32.totalorder %s113, %s116
      %p122 = scmp.eq.s32.totalorder %s16, 0
      %p123 = por %p121, %p122
      %p124 = scmp.ne.s32.totalorder %s113, %s116
      %p125 = scmp.eq.s32.totalorder %s21, 3
      %p126 = por %p124, %p125
      %p127 = scmp.ne.s32.totalorder %s116, %s117
      %p128 = scmp.eq.s32.totalorder %s21, 0
      %p129 = por %p127, %p128
      %p130 = scmp.ne.s32.totalorder %s116, %s117
      %p131 = scmp.eq.s32.totalorder %s22, 3
      %p132 = por %p130, %p131
      %p134 = scmp.ne.s32.totalorder %s117, %s133
      %p135 = scmp.eq.s32.totalorder %s22, 0
      %p136 = por %p134, %p135
      %p137 = scmp.le.s32.totalorder 1, %s16
      %p138 = scmp.lt.s32.totalorder %s16, 5
      %p139 = pnand %p137, %p138
      %p140 = pneg %p139
      // Predicated region
      $region9: #{tpu_custom_call.1} parent=5 // pred_check
        _
      $region10: #{tpu_custom_call.1} parent=5 // pred_check_branch
        %142 = sbr.rel (%p139) target = $region12
      $region11: #{tpu_custom_call.1} parent=5 // pred_region
        %s143 = ssub.s32 %s16, 1
        // Predicated region
        $region13: #{tpu_custom_call.1} parent=11 // pred_check
          %p144 = pneg %p77
        $region14: #{tpu_custom_call.1} parent=11 // pred_check_branch
          %146 = sbr.rel (%p144) target = $region16
        $region15: #{tpu_custom_call.1} parent=11 // pred_region
          _
        $region16: #{tpu_custom_call.1} parent=11 // pred_fallthru
          _
      $region12: #{tpu_custom_call.1} parent=5 // pred_fallthru
        _
      %p147 = scmp.lt.s32.totalorder %s16, 4
      // Predicated region
      $region17: #{tpu_custom_call.1} parent=5 // pred_check
        %p148 = pneg %p147
      $region18: #{tpu_custom_call.1} parent=5 // pred_check_branch
        %150 = sbr.rel (%p148) target = $region20
      $region19: #{tpu_custom_call.1} parent=5 // pred_region
        // Predicated region
        $region21: #{tpu_custom_call.1} parent=19 // pred_check
          %p151 = pneg %p50
        $region22: #{tpu_custom_call.1} parent=19 // pred_check_branch
          %153 = sbr.rel (%p151) target = $region24
        $region23: #{tpu_custom_call.1} parent=19 // pred_region
          %s154 = smul.u32 16, %s24
          %p155 = scmp.lt.s32.totalorder %s23, 1
          %s156 = scalar_select %p155, %s23, 1
          %p157 = scmp.lt.s32.totalorder %s154, 31
          %s158 = scalar_select %p157, %s154, 31
          %s159 = smul.addr %s156, 32
          %s160 = sadd.s32 %s158, %s159
          %s161 = smul.addr %s160, 8
          %s162 = scalar_lea.vmem %s0, %s161
          %s163 = smul.u32 16, %s24
        $region24: #{tpu_custom_call.1} parent=19 // pred_fallthru
          _
      $region20: #{tpu_custom_call.1} parent=5 // pred_fallthru
        _
      %p164 = scmp.le.s32.totalorder 1, %s16
      %p165 = scmp.lt.s32.totalorder %s16, 5
      %p166 = pnand %p164, %p165
      %p167 = pneg %p166
      // Predicated region
      $region25: #{tpu_custom_call.1} parent=5 // pred_check
        _
      $region26: #{tpu_custom_call.1} parent=5 // pred_check_branch
        %169 = sbr.rel (%p166) target = $region28
      $region27: #{tpu_custom_call.1} parent=5 // pred_region
        %s170 = ssub.s32 %s16, 1
        %s171 = smul.u32 16, %s26
        %p172 = scmp.lt.s32.totalorder %s25, 1
        %s173 = scalar_select %p172, %s25, 1
        %p174 = scmp.lt.s32.totalorder %s171, 31
        %s175 = scalar_select %p174, %s171, 31
        %s176 = smul.addr %s173, 32
        %s177 = sadd.s32 %s175, %s176
        %s178 = smul.addr %s177, 8
        %s179 = scalar_lea.vmem %s0, %s178
        %p180 = pneg %p56
        %p181 = pneg %p53
        %p182 = pneg %p77
        %p183 = pneg %p74
        %p184 = pneg %p103
        %p185 = pneg %p100
        %s186 = sand.u32 %s90, 1
        %s187 = scalar_lea.sflag [#allocation5], %s186
        %s188 = sand.u32 %s90, 1
        %s189 = scalar_lea.vmem [#allocation4], %s188
        %p190 = pneg %p129
        %p191 = pneg %p126
        %s192 = sand.u32 %s116, 1
        %s193 = scalar_lea.sflag [#allocation7], %s192
        %s194 = sand.u32 %s116, 1
        %s195 = scalar_lea.vmem [#allocation6], %s194
        %s196 = smul.u32 16, %s26
        %p197 = scmp.lt.s32.totalorder %s25, 1
        %s198 = scalar_select %p197, %s25, 1
        %p199 = scmp.lt.s32.totalorder %s196, 31
        %s200 = scalar_select %p199, %s196, 31
        %s201 = smul.addr %s198, 32
        %s202 = sadd.s32 %s200, %s201
        %s203 = smul.addr %s202, 8
        %s204 = scalar_lea.vmem %s0, %s203
        %s205 = smul.u32 16, %s26
        %p206 = scmp.eq.s32.totalorder %s26, 0
        // Predicated region
        $region29: #{tpu_custom_call.1} parent=27 // pred_check
          %p207 = pneg %p206
        $region30: #{tpu_custom_call.1} parent=27 // pred_check_branch
          %209 = sbr.rel (%p207) target = $region32
        $region31: #{tpu_custom_call.1} parent=27 // pred_region
          %vm210 = vcmask 516096
          %211 = vst.msk [vmem:[#allocation2] sm:$0x1] %vm210, 0.0
          %212 = vst.msk [vmem:[#allocation3] sm:$0x1] %vm210, 0.0
        $region32: #{tpu_custom_call.1} parent=27 // pred_fallthru
          _
        %v213 = vld [vmem:[%s204] sm:$0xff]
        %v214 = vld [vmem:[%s204 + $0x8] sm:$0xff]
        %v215 = vld [vmem:[%s204 + $0x10] sm:$0xff]
        %v216 = vld [vmem:[%s204 + $0x18] sm:$0xff]
        %v217 = vld [vmem:[%s204 + $0x20] sm:$0xff]
        %v218 = vld [vmem:[%s204 + $0x28] sm:$0xff]
        %v219 = vld [vmem:[%s204 + $0x30] sm:$0xff]
        %v220 = vld [vmem:[%s204 + $0x38] sm:$0xff]
        %v221 = vld [vmem:[%s204 + $0x40] sm:$0xff]
        %v222 = vld [vmem:[%s204 + $0x48] sm:$0xff]
        %v223 = vld [vmem:[%s204 + $0x50] sm:$0xff]
        %v224 = vld [vmem:[%s204 + $0x58] sm:$0xff]
        %v225 = vld [vmem:[%s204 + $0x60] sm:$0xff]
        %v226 = vld [vmem:[%s204 + $0x68] sm:$0xff]
        %v227 = vld [vmem:[%s204 + $0x70] sm:$0xff]
        %v228 = vld [vmem:[%s204 + $0x78] sm:$0xff]
        %v229 = vld [vmem:[#allocation2] sm:$0x1]
        %vm230 = vcmask 523264
        %v231 = vsel %vm230, %v213, 0.0
        %v232 = vsel %vm230, %v214, 0.0
        %v233 = vadd.f32 %v231, %v232
        %v234 = vsel %vm230, %v215, 0.0
        %v235 = vadd.f32 %v233, %v234
        %v236 = vsel %vm230, %v216, 0.0
        %v237 = vadd.f32 %v235, %v236
        %v238 = vsel %vm230, %v217, 0.0
        %v239 = vadd.f32 %v237, %v238
        %v240 = vsel %vm230, %v218, 0.0
        %v241 = vadd.f32 %v239, %v240
        %v242 = vsel %vm230, %v219, 0.0
        %v243 = vadd.f32 %v241, %v242
        %v244 = vsel %vm230, %v220, 0.0
        %v245 = vadd.f32 %v243, %v244
        %v246 = vsel %vm230, %v221, 0.0
        %v247 = vadd.f32 %v245, %v246
        %v248 = vsel %vm230, %v222, 0.0
        %v249 = vadd.f32 %v247, %v248
        %v250 = vsel %vm230, %v223, 0.0
        %v251 = vadd.f32 %v249, %v250
        %v252 = vsel %vm230, %v224, 0.0
        %v253 = vadd.f32 %v251, %v252
        %v254 = vsel %vm230, %v225, 0.0
        %v255 = vadd.f32 %v253, %v254
        %v256 = vsel %vm230, %v226, 0.0
        %v257 = vadd.f32 %v255, %v256
        %v258 = vsel %vm230, %v227, 0.0
        %v259 = vadd.f32 %v257, %v258
        %v260 = vsel %vm230, %v228, 0.0
        %v261 = vadd.f32 %v259, %v260
        %v262 = vrot.slane %v261, 4
        %v263 = vadd.f32 %v261, %v262
        %v264 = vrot.slane %v263, 2
        %v265 = vadd.f32 %v263, %v264
        %v266 = vrot.slane %v265, 1
        %v267 = vadd.f32 %v265, %v266
        %v268 = vadd.f32 %v229, %v267
        %vm269 = vcmask 516096
        %270 = vst.msk [vmem:[#allocation2] sm:$0x1] %vm269, %v268
        %v271 = vld [vmem:[#allocation3] sm:$0x1]
        %v272 = vmul.f32 %v213, %v213
        %v273 = vmul.f32 %v214, %v214
        %v274 = vmul.f32 %v215, %v215
        %v275 = vmul.f32 %v216, %v216
        %v276 = vmul.f32 %v217, %v217
        %v277 = vmul.f32 %v218, %v218
        %v278 = vmul.f32 %v219, %v219
        %v279 = vmul.f32 %v220, %v220
        %v280 = vmul.f32 %v221, %v221
        %v281 = vmul.f32 %v222, %v222
        %v282 = vmul.f32 %v223, %v223
        %v283 = vmul.f32 %v224, %v224
        %v284 = vmul.f32 %v225, %v225
        %v285 = vmul.f32 %v226, %v226
        %v286 = vmul.f32 %v227, %v227
        %v287 = vmul.f32 %v228, %v228
        %v288 = vsel %vm230, %v272, 0.0
        %v289 = vsel %vm230, %v273, 0.0
        %v290 = vadd.f32 %v288, %v289
        %v291 = vsel %vm230, %v274, 0.0
        %v292 = vadd.f32 %v290, %v291
        %v293 = vsel %vm230, %v275, 0.0
        %v294 = vadd.f32 %v292, %v293
        %v295 = vsel %vm230, %v276, 0.0
        %v296 = vadd.f32 %v294, %v295
        %v297 = vsel %vm230, %v277, 0.0
        %v298 = vadd.f32 %v296, %v297
        %v299 = vsel %vm230, %v278, 0.0
        %v300 = vadd.f32 %v298, %v299
        %v301 = vsel %vm230, %v279, 0.0
        %v302 = vadd.f32 %v300, %v301
        %v303 = vsel %vm230, %v280, 0.0
        %v304 = vadd.f32 %v302, %v303
        %v305 = vsel %vm230, %v281, 0.0
        %v306 = vadd.f32 %v304, %v305
        %v307 = vsel %vm230, %v282, 0.0
        %v308 = vadd.f32 %v306, %v307
        %v309 = vsel %vm230, %v283, 0.0
        %v310 = vadd.f32 %v308, %v309
        %v311 = vsel %vm230, %v284, 0.0
        %v312 = vadd.f32 %v310, %v311
        %v313 = vsel %vm230, %v285, 0.0
        %v314 = vadd.f32 %v312, %v313
        %v315 = vsel %vm230, %v286, 0.0
        %v316 = vadd.f32 %v314, %v315
        %v317 = vsel %vm230, %v287, 0.0
        %v318 = vadd.f32 %v316, %v317
        %v319 = vrot.slane %v318, 4
        %v320 = vadd.f32 %v318, %v319
        %v321 = vrot.slane %v320, 2
        %v322 = vadd.f32 %v320, %v321
        %v323 = vrot.slane %v322, 1
        %v324 = vadd.f32 %v322, %v323
        %v325 = vadd.f32 %v271, %v324
        %326 = vst.msk [vmem:[#allocation3] sm:$0x1] %vm269, %v325
        %p327 = scmp.eq.s32.totalorder %s26, 1
        // Predicated region
        $region33: #{tpu_custom_call.1} parent=27 // pred_check
          %p328 = pneg %p327
        $region34: #{tpu_custom_call.1} parent=27 // pred_check_branch
          %330 = sbr.rel (%p328) target = $region36
        $region35: #{tpu_custom_call.1} parent=27 // pred_region
          %v331 = vld [vmem:[%s1] sm:$0xff]
          %v332 = vld [vmem:[%s1 + $0x8] sm:$0xff]
          %v333 = vld [vmem:[%s1 + $0x10] sm:$0xff]
          %v334 = vld [vmem:[%s1 + $0x18] sm:$0xff]
          %v335 = vld [vmem:[%s1 + $0x20] sm:$0xff]
          %v336 = vld [vmem:[%s1 + $0x28] sm:$0xff]
          %v337 = vld [vmem:[%s1 + $0x30] sm:$0xff]
          %v338 = vld [vmem:[%s1 + $0x38] sm:$0xff]
          %v339 = vld [vmem:[#allocation2] sm:$0x1]
          %v341 = vsel %vm230, %v339, 0
          %343 = vmatprep.subr.mxu0 0.0
          %344 = vmatpush1.msra.mxu0 %v331
          %345 = vmatprep.subr.mxu0 0.0
          %346 = vmatpush1.msra.mxu0 %v332
          %347 = vmatprep.subr.mxu0 0.0
          %348 = vmatpush1.msra.mxu0 %v333
          %349 = vmatprep.subr.mxu0 0.0
          %350 = vmatpush1.msra.mxu0 %v334
          %351 = vmatprep.subr.mxu0 0.0
          %352 = vmatpush1.msra.mxu0 %v335
          %353 = vmatprep.subr.mxu0 0.0
          %354 = vmatpush1.msra.mxu0 %v336
          %355 = vmatprep.subr.mxu0 0.0
          %356 = vmatpush1.msra.mxu0 %v337
          %357 = vmatprep.subr.mxu0 0.0
          %358 = vmatpush1.msra.mxu0 %v338
          %359 = vmatprep.subr.mxu0 0.0
          %360 = vmatpush1.msra.mxu0 0.0
          %361 = vmatprep.subr.mxu0 0.0
          %362 = vmatpush1.msra.mxu0 0.0
          %363 = vmatprep.subr.mxu0 0.0
          %364 = vmatpush1.msra.mxu0 0.0
          %365 = vmatprep.subr.mxu0 0.0
          %366 = vmatpush1.msra.mxu0 0.0
          %367 = vmatprep.subr.mxu0 0.0
          %368 = vmatpush1.msra.mxu0 0.0
          %369 = vmatprep.subr.mxu0 0.0
          %370 = vmatpush1.msra.mxu0 0.0
          %371 = vmatprep.subr.mxu0 0.0
          %372 = vmatpush1.msra.mxu0 0.0
          %373 = vmatprep.subr.mxu0 0.0
          %374 = vmatpush1.msra.mxu0 0.0
          %375 = vmatprep.subr.mxu0 0.0
          %376 = vmatpush1.msra.mxu0 0.0
          %377 = vmatprep.subr.mxu0 0.0
          %378 = vmatpush1.msra.mxu0 0.0
          %379 = vmatprep.subr.mxu0 0.0
          %380 = vmatpush1.msra.mxu0 0.0
          %381 = vmatprep.subr.mxu0 0.0
          %382 = vmatpush1.msra.mxu0 0.0
          %383 = vmatprep.subr.mxu0 0.0
          %384 = vmatpush1.msra.mxu0 0.0
          %385 = vmatprep.subr.mxu0 0.0
          %386 = vmatpush1.msra.mxu0 0.0
          %387 = vmatprep.subr.mxu0 0.0
          %388 = vmatpush1.msra.mxu0 0.0
          %389 = vmatprep.subr.mxu0 0.0
          %390 = vmatpush1.msra.mxu0 0.0
          %391 = vmatprep.subr.mxu0 0.0
          %392 = vmatpush1.msra.mxu0 0.0
          %393 = vmatprep.subr.mxu0 0.0
          %394 = vmatpush1.msra.mxu0 0.0
          %395 = vmatprep.subr.mxu0 0.0
          %396 = vmatpush1.msra.mxu0 0.0
          %397 = vmatprep.subr.mxu0 0.0
          %398 = vmatpush1.msra.mxu0 0.0
          %399 = vmatprep.subr.mxu0 0.0
          %400 = vmatpush1.msra.mxu0 0.0
          %401 = vmatprep.subr.mxu0 0.0
          %402 = vmatpush1.msra.mxu0 0.0
          %403 = vmatprep.subr.mxu0 0.0
          %404 = vmatpush1.msra.mxu0 0.0
          %405 = vmatprep.subr.mxu0 0.0
          %406 = vmatpush1.msra.mxu0 0.0
          %407 = vmatprep.mubr.f32.mxu0 0.0
          %408 = vmatmul.mubr.f32.gmra.mrb[0].mxu0 %v341
          %v409 = vpop.f32.mrb[0].mxu0
          %v410 = vadd.f32 0.0, %v409
          %v411 = vpop.f32.mrb[0].mxu0
          %412 = vdwg.mxu0
          %v413 = vld [vmem:[#allocation3] sm:$0x1]
          %v415 = vsel %vm230, %v413, 0
          %417 = vmatprep.subr.mxu0 0.0
          %418 = vmatpush1.msra.mxu0 %v331
          %419 = vmatprep.subr.mxu0 0.0
          %420 = vmatpush1.msra.mxu0 %v332
          %421 = vmatprep.subr.mxu0 0.0
          %422 = vmatpush1.msra.mxu0 %v333
          %423 = vmatprep.subr.mxu0 0.0
          %424 = vmatpush1.msra.mxu0 %v334
          %425 = vmatprep.subr.mxu0 0.0
          %426 = vmatpush1.msra.mxu0 %v335
          %427 = vmatprep.subr.mxu0 0.0
          %428 = vmatpush1.msra.mxu0 %v336
          %429 = vmatprep.subr.mxu0 0.0
          %430 = vmatpush1.msra.mxu0 %v337
          %431 = vmatprep.subr.mxu0 0.0
          %432 = vmatpush1.msra.mxu0 %v338
          %433 = vmatprep.subr.mxu0 0.0
          %434 = vmatpush1.msra.mxu0 0.0
          %435 = vmatprep.subr.mxu0 0.0
          %436 = vmatpush1.msra.mxu0 0.0
          %437 = vmatprep.subr.mxu0 0.0
          %438 = vmatpush1.msra.mxu0 0.0
          %439 = vmatprep.subr.mxu0 0.0
          %440 = vmatpush1.msra.mxu0 0.0
          %441 = vmatprep.subr.mxu0 0.0
          %442 = vmatpush1.msra.mxu0 0.0
          %443 = vmatprep.subr.mxu0 0.0
          %444 = vmatpush1.msra.mxu0 0.0
          %445 = vmatprep.subr.mxu0 0.0
          %446 = vmatpush1.msra.mxu0 0.0
          %447 = vmatprep.subr.mxu0 0.0
          %448 = vmatpush1.msra.mxu0 0.0
          %449 = vmatprep.subr.mxu0 0.0
          %450 = vmatpush1.msra.mxu0 0.0
          %451 = vmatprep.subr.mxu0 0.0
          %452 = vmatpush1.msra.mxu0 0.0
          %453 = vmatprep.subr.mxu0 0.0
          %454 = vmatpush1.msra.mxu0 0.0
          %455 = vmatprep.subr.mxu0 0.0
          %456 = vmatpush1.msra.mxu0 0.0
          %457 = vmatprep.subr.mxu0 0.0
          %458 = vmatpush1.msra.mxu0 0.0
          %459 = vmatprep.subr.mxu0 0.0
          %460 = vmatpush1.msra.mxu0 0.0
          %461 = vmatprep.subr.mxu0 0.0
          %462 = vmatpush1.msra.mxu0 0.0
          %463 = vmatprep.subr.mxu0 0.0
          %464 = vmatpush1.msra.mxu0 0.0
          %465 = vmatprep.subr.mxu0 0.0
          %466 = vmatpush1.msra.mxu0 0.0
          %467 = vmatprep.subr.mxu0 0.0
          %468 = vmatpush1.msra.mxu0 0.0
          %469 = vmatprep.subr.mxu0 0.0
          %470 = vmatpush1.msra.mxu0 0.0
          %471 = vmatprep.subr.mxu0 0.0
          %472 = vmatpush1.msra.mxu0 0.0
          %473 = vmatprep.subr.mxu0 0.0
          %474 = vmatpush1.msra.mxu0 0.0
          %475 = vmatprep.subr.mxu0 0.0
          %476 = vmatpush1.msra.mxu0 0.0
          %477 = vmatprep.subr.mxu0 0.0
          %478 = vmatpush1.msra.mxu0 0.0
          %479 = vmatprep.subr.mxu0 0.0
          %480 = vmatpush1.msra.mxu0 0.0
          %481 = vmatprep.mubr.f32.mxu0 0.0
          %482 = vmatmul.mubr.f32.gmra.mrb[0].mxu0 %v415
          %v483 = vpop.f32.mrb[0].mxu0
          %v484 = vadd.f32 0.0, %v483
          %v485 = vpop.f32.mrb[0].mxu0
          %486 = vdwg.mxu0
          %v487 = vmul.f32 %v410, %v410
          %v488 = vsub.f32 %v484, %v487
          %v489 = vmax.f32 %v488, 0.0
          %490 = vst.msk [vmem:[%s189] sm:$0x1] %vm269, %v410
          %v491 = vadd.f32 %v489, 1e-06
          %v492 = vrsqrt.pop %v491
          %493 = vst.msk [vmem:[%s195] sm:$0x1] %vm269, %v492
        $region36: #{tpu_custom_call.1} parent=27 // pred_fallthru
          _
        %s494 = sand.u32 %s90, 1
        %s495 = scalar_lea.sflag [#allocation5], %s494
        %s496 = sand.u32 %s90, 1
        %s497 = scalar_lea.vmem [#allocation4], %s496
        %s498 = sand.u32 %s116, 1
        %s499 = scalar_lea.sflag [#allocation7], %s498
        %s500 = sand.u32 %s116, 1
        %s501 = scalar_lea.vmem [#allocation6], %s500
        // Predicated region
        $region37: #{tpu_custom_call.1} parent=27 // pred_check
          %p502 = pneg %p100
        $region38: #{tpu_custom_call.1} parent=27 // pred_check_branch
          %504 = sbr.rel (%p502) target = $region40
        $region39: #{tpu_custom_call.1} parent=27 // pred_region
          %s506 = ssub.s32 16, 16
          %507 = vsyncadd %s495, %s506
          %s508 = smul.addr %s25, 16
          %s509 = scalar_lea.hbm %s2, %s508
          %s511 = sshll.u32 %s497, 4
          %s512 = int_to_ptr.vmem [resolvable:$true] %s511
          %514 = dma.vmem_to_hbm [thread:$0]  %s512, 16, %s509, %s495
        $region40: #{tpu_custom_call.1} parent=27 // pred_fallthru
          _
        // Predicated region
        $region41: #{tpu_custom_call.1} parent=27 // pred_check
          %p515 = pneg %p126
        $region42: #{tpu_custom_call.1} parent=27 // pred_check_branch
          %517 = sbr.rel (%p515) target = $region44
        $region43: #{tpu_custom_call.1} parent=27 // pred_region
          %s519 = ssub.s32 16, 16
          %520 = vsyncadd %s499, %s519
          %s521 = smul.addr %s25, 16
          %s522 = scalar_lea.hbm %s3, %s521
          %s524 = sshll.u32 %s501, 4
          %s525 = int_to_ptr.vmem [resolvable:$true] %s524
          %527 = dma.vmem_to_hbm [thread:$0]  %s525, 16, %s522, %s499
        $region44: #{tpu_custom_call.1} parent=27 // pred_fallthru
          _
      $region28: #{tpu_custom_call.1} parent=5 // pred_fallthru
        _
      %p528 = scmp.le.s32.totalorder 2, %s16
      // Predicated region
      $region45: #{tpu_custom_call.1} parent=5 // pred_check
        %p529 = pneg %p528
      $region46: #{tpu_custom_call.1} parent=5 // pred_check_branch
        %531 = sbr.rel (%p529) target = $region48
      $region47: #{tpu_custom_call.1} parent=5 // pred_region
        %s532 = ssub.s32 %s16, 2
        // Predicated region
        $region49: #{tpu_custom_call.1} parent=47 // pred_check
          %p533 = pneg %p106
        $region50: #{tpu_custom_call.1} parent=47 // pred_check_branch
          %535 = sbr.rel (%p533) target = $region52
        $region51: #{tpu_custom_call.1} parent=47 // pred_region
          %s536 = sand.u32 %s91, 1
          %s537 = scalar_lea.sflag [#allocation5], %s536
          %s538 = sand.u32 %s91, 1
          %s539 = scalar_lea.vmem [#allocation4], %s538
          %540 = dma.done %s537, 16
        $region52: #{tpu_custom_call.1} parent=47 // pred_fallthru
          _
        // Predicated region
        $region53: #{tpu_custom_call.1} parent=47 // pred_check
          %p541 = pneg %p132
        $region54: #{tpu_custom_call.1} parent=47 // pred_check_branch
          %543 = sbr.rel (%p541) target = $region56
        $region55: #{tpu_custom_call.1} parent=47 // pred_region
          %s544 = sand.u32 %s117, 1
          %s545 = scalar_lea.sflag [#allocation7], %s544
          %s546 = sand.u32 %s117, 1
          %s547 = scalar_lea.vmem [#allocation6], %s546
          %548 = dma.done %s545, 16
        $region56: #{tpu_custom_call.1} parent=47 // pred_fallthru
          _
      $region48: #{tpu_custom_call.1} parent=5 // pred_fallthru
        _
    $region6: #{tpu_custom_call.1} parent=1 // loop_footer
      %s20 = sadd.s32 1, %s16
    $region7: #{tpu_custom_call.1} parent=1 // loop_footer_branch
      %15 = sbr.rel target = $region3
    $region8: #{tpu_custom_call.1} parent=1 // loop_exit
      _
    %549 = vsyncpa [#allocation5], 1
    %s550 = scalar_lea.sflag [#allocation5], 1
    %551 = vsyncpa %s550, 1
    %552 = vsyncpa [#allocation7], 1
    %s553 = scalar_lea.sflag [#allocation7], 1
    %554 = vsyncpa %s553, 1

</llo_original>
